<compile_context>
chip_gen: v7x
topology: tpu7x:2x2x1
jax: 0.10.0
libtpu: 0.0.40
codegen_flags: <defaults>
</compile_context>

<pallas_src>
import functools

import jax
import jax.numpy as jnp
from jax.experimental import pallas as pl
from jax.experimental.pallas import tpu as pltpu

_LANES = 128
# Per-grid-step VMEM budget across the three (x, noise, out) blocks.
_TARGET_BLOCK_BYTES = 6 * 1024 * 1024


def _add_noise_kernel(x_ref, n_ref, o_ref):
    # Add in f32 (noise is f32), cast once at the store.
    x = x_ref[...].astype(jnp.float32)
    o_ref[...] = (x + n_ref[...]).astype(o_ref.dtype)


def _pick_lane_width(total: int) -> int:
    for w in (4096, 2048, 1024, 512, 256, 128):
        if total % w == 0:
            return w
    return _LANES  # ragged total: pad up to a multiple of 128


@functools.partial(jax.jit, static_argnames=("training",))
def gaussian_noise_layer(x, key, training: bool = True):
    """JAX/Pallas equivalent of GaussianNoiseLayer.forward."""
    if not training:
        return x

    orig_shape = x.shape
    orig_dtype = x.dtype
    total = x.size

    # Lane-dense 2D slab: (rows, lane_w), lane_w a wide multiple of 128.
    lane_w = _pick_lane_width(total)
    padded_total = pl.cdiv(total, lane_w) * lane_w
    rows = padded_total // lane_w

    x_flat = x.reshape(-1)
    if padded_total != total:  # rare ragged case only
        x_flat = jnp.pad(x_flat, (0, padded_total - total))
    x2d = x_flat.reshape(rows, lane_w)

    # Standard-normal noise, f32, generated directly at the slab shape.
    noise2d = jax.random.normal(key, (rows, lane_w), dtype=jnp.float32)

    # Big blocks: ~6 MiB total per grid step across x/noise/out buffers.
    bytes_per_row = lane_w * (2 * jnp.dtype(orig_dtype).itemsize + 4)
    block_rows = max(8, (_TARGET_BLOCK_BYTES // bytes_per_row) // 8 * 8)
    block_rows = min(rows, block_rows)
    num_blocks = pl.cdiv(rows, block_rows)

    out2d = pl.pallas_call(
        _add_noise_kernel,
        out_shape=jax.ShapeDtypeStruct((rows, lane_w), orig_dtype),
        grid=(num_blocks,),
        in_specs=[
            pl.BlockSpec((block_rows, lane_w), lambda i: (i, 0)),
            pl.BlockSpec((block_rows, lane_w), lambda i: (i, 0)),
        ],
        out_specs=pl.BlockSpec((block_rows, lane_w), lambda i: (i, 0)),
        compiler_params=pltpu.CompilerParams(
            dimension_semantics=("parallel",),  # independent blocks -> megacore
        ),
    )(x2d, noise2d)

    out_flat = out2d.reshape(-1)
    if padded_total != total:
        out_flat = out_flat[:total]
    return out_flat.reshape(orig_shape)


if __name__ == "__main__":
    key = jax.random.PRNGKey(0)
    x_key, noise_key = jax.random.split(key)
    # NCHW input consistent with a small conv feature map.
    x = jax.random.normal(x_key, (2, 4, 16, 16), dtype=jnp.float32)

    # Training mode: x + Gaussian noise (add fused in the Pallas kernel).
    y_train = gaussian_noise_layer(x, noise_key, training=True)
    y_train = jax.block_until_ready(y_train)
    assert y_train.shape == x.shape and y_train.dtype == x.dtype
    diff = y_train - x
    assert float(jnp.max(jnp.abs(diff))) > 0.0
    # Added noise should be roughly standard normal.
    assert abs(float(jnp.mean(diff))) < 0.2
    assert 0.5 < float(jnp.std(diff)) < 1.5

    # Eval mode: identity.
    y_eval = gaussian_noise_layer(x, noise_key, training=False)
    y_eval = jax.block_until_ready(y_eval)
    assert bool(jnp.all(y_eval == x))

    print("KERNEL_OK")
</pallas_src>

<mosaic_0001>
module attributes {stable_mosaic.version = 11 : i64} {
  func.func @_add_noise_kernel(%arg0: i32, %arg1: memref<1x2048xf32, #tpu.memory_space<vmem>>, %arg2: memref<1x2048xf32, #tpu.memory_space<vmem>>, %arg3: memref<1x2048xf32, #tpu.memory_space<vmem>>) attributes {dimension_semantics = [#tpu.dimension_semantics<parallel>], iteration_bounds = array<i64: 1>, scalar_prefetch = 0 : i64, scratch_operands = 0 : i64, tpu.core_type = #tpu.core_type<tc>, window_params = [{transform_indices = @transform_0, window_bounds = array<i64: 1, 2048>}, {transform_indices = @transform_1, window_bounds = array<i64: 1, 2048>}, {transform_indices = @transform_2, window_bounds = array<i64: 1, 2048>}]} {
    %c0 = arith.constant 0 : index
    %c0_0 = arith.constant 0 : index
    %0 = vector.load %arg1[%c0, %c0_0] : memref<1x2048xf32, #tpu.memory_space<vmem>>, vector<1x2048xf32>
    %c0_1 = arith.constant 0 : index
    %c0_2 = arith.constant 0 : index
    %1 = vector.load %arg2[%c0_1, %c0_2] : memref<1x2048xf32, #tpu.memory_space<vmem>>, vector<1x2048xf32>
    %2 = arith.addf %0, %1 : vector<1x2048xf32>
    %c0_3 = arith.constant 0 : index
    %c0_4 = arith.constant 0 : index
    %3 = vector.load %arg3[%c0_3, %c0_4] : memref<1x2048xf32, #tpu.memory_space<vmem>>, vector<1x2048xf32>
    tpu.vector_store %arg3[%c0_3, %c0_4], %2 {strides = array<i32>} : memref<1x2048xf32, #tpu.memory_space<vmem>>, vector<1x2048xf32>,
    return
  }
  func.func @transform_0(%arg0: i32) -> (i32, i32) {
    %c0_i32 = arith.constant 0 : i32
    %c0_i32_0 = arith.constant 0 : i32
    return %arg0, %c0_i32 : i32, i32
  }
  func.func @transform_1(%arg0: i32) -> (i32, i32) {
    %c0_i32 = arith.constant 0 : i32
    %c0_i32_0 = arith.constant 0 : i32
    return %arg0, %c0_i32 : i32, i32
  }
  func.func @transform_2(%arg0: i32) -> (i32, i32) {
    %c0_i32 = arith.constant 0 : i32
    %c0_i32_0 = arith.constant 0 : i32
    return %arg0, %c0_i32 : i32, i32
  }
}

</mosaic_0001>

<llo_original>
// kernel: gaussian_noise_layer.1
$region0: #{gaussian_noise_layer.1}
  #allocation0 [shape = 'u32[]', space=smem, size = 0x4, offset = 0x4, fixed_abs, tag = 'smem constant byte address 0x4 - core index']
  #allocation1 [shape = 'u32[144,128]{1,0:T(1,128)}', space=vmem, size = 0x12000, scoped, tag = 'internal scratch']
  %s0 = inlined_call_operand.vmem [shape: f32[1,2048], index: 0, kind: input, shape index: {}]
  %s1 = inlined_call_operand.vmem [shape: f32[1,2048], index: 1, kind: input, shape index: {}]
  %s2 = inlined_call_operand.vmem [shape: f32[1,2048], index: 2, kind: output, shape index: {}]
  %s3 = sld [smem:[#allocation0]]
  $region18: #{gaussian_noise_layer.1} parent=0
    _
  %s5 = ssub.s32 1, %s3
  %s6 = scalar_select 0, %s5, %s3
  // Predicated region
  $region2: #{gaussian_noise_layer.1} parent=0 // pred_check
    _
  $region3: #{gaussian_noise_layer.1} parent=0 // pred_check_branch
    %8 = sbr.rel (0) target = $region5
  $region4: #{gaussian_noise_layer.1} parent=0 // pred_region
    _
  $region5: #{gaussian_noise_layer.1} parent=0 // pred_fallthru
    _
  // Predicated region
  $region6: #{gaussian_noise_layer.1} parent=0 // pred_check
    _
  $region7: #{gaussian_noise_layer.1} parent=0 // pred_check_branch
    %10 = sbr.rel (0) target = $region9
  $region8: #{gaussian_noise_layer.1} parent=0 // pred_region
    _
  $region9: #{gaussian_noise_layer.1} parent=0 // pred_fallthru
    _
  %v11 = vld [vmem:[%s0] sm:$0xff]
  %v12 = vld [vmem:[%s0 + $0x8] sm:$0xff]
  %v13 = vld [vmem:[%s1] sm:$0xff]
  %v14 = vld [vmem:[%s1 + $0x8] sm:$0xff]
  %v15 = vadd.f32 %v11, %v13
  %v16 = vadd.f32 %v12, %v14
  %17 = vst [vmem:[%s2] sm:$0xff] %v15
  %18 = vst [vmem:[%s2 + $0x8] sm:$0xff] %v16
  // Predicated region
  $region10: #{gaussian_noise_layer.1} parent=0 // pred_check
    _
  $region11: #{gaussian_noise_layer.1} parent=0 // pred_check_branch
    %20 = sbr.rel (0) target = $region13
  $region12: #{gaussian_noise_layer.1} parent=0 // pred_region
    _
  $region13: #{gaussian_noise_layer.1} parent=0 // pred_fallthru
    _
  // Predicated region
  $region14: #{gaussian_noise_layer.1} parent=0 // pred_check
    _
  $region15: #{gaussian_noise_layer.1} parent=0 // pred_check_branch
    %22 = sbr.rel (0) target = $region17
  $region16: #{gaussian_noise_layer.1} parent=0 // pred_region
    _
  $region17: #{gaussian_noise_layer.1} parent=0 // pred_fallthru
    _

</llo_original>
